<compile_context>
chip_gen: v7x
topology: tpu7x:2x2x1
jax: 0.10.0
libtpu: 0.0.40
codegen_flags: <defaults>
</compile_context>

<pallas_src>
import functools

import jax
import jax.numpy as jnp
from jax.experimental import pallas as pl
from jax.experimental.pallas import tpu as pltpu

LN_EPS = 1e-5   # torch.nn.LayerNorm default
LANE = 128
SUBLANE = 8


def _round_up(n, m):
    return ((n + m - 1) // m) * m


def actor_kernel(x_ref, w1_ref, b1_ref, w2_ref, b2_ref, w3_ref, b3_ref, o_ref):
    x = x_ref[...].astype(jnp.float32)                        # [TB, obs]

    # LayerNorm statistics (affine already folded into W1/b1 in the wrapper).
    mean = jnp.mean(x, axis=-1, keepdims=True)
    var = jnp.mean(jnp.square(x - mean), axis=-1, keepdims=True)
    xn = (x - mean) * jax.lax.rsqrt(var + LN_EPS)

    mx_dt = w1_ref.dtype  # f32 or bf16 MXU operands; accumulate in f32 always

    # fc1 (+ folded LN affine) + ReLU
    h1 = jnp.dot(xn.astype(mx_dt), w1_ref[...],
                 preferred_element_type=jnp.float32)
    h1 = jnp.maximum(h1 + b1_ref[...], 0.0)                   # [TB, hid1]

    # fc2 + ReLU
    h2 = jnp.dot(h1.astype(mx_dt), w2_ref[...],
                 preferred_element_type=jnp.float32)
    h2 = jnp.maximum(h2 + b2_ref[...], 0.0)                   # [TB, hid2]

    # fc3 + Tanh (lane-padded output -> unmasked dense stores)
    y = jnp.dot(h2.astype(mx_dt), w3_ref[...],
                preferred_element_type=jnp.float32)
    o_ref[...] = jnp.tanh(y + b3_ref[...]).astype(o_ref.dtype)


@functools.partial(jax.jit, static_argnames=("block_b", "use_bf16"))
def actor_forward(x, params, *, block_b=256, use_bf16=False):
    ln_g, ln_b, w1, b1, w2, b2, w3, b3 = params
    B, obs = x.shape
    hid1 = w1.shape[1]
    hid2 = w2.shape[1]
    act = w3.shape[1]

    # --- wrapper-side prep (compiled once, outside the grid loop) ---------
    # Fold LayerNorm elementwise affine into fc1.
    w1f = ln_g.reshape(obs, 1) * w1                     # [obs, hid1]
    b1f = b1 + ln_b.reshape(1, obs) @ w1                # [1, hid1], stays f32

    # Pad the tiny action dim up to a full lane width for dense stores.
    act_pad = _round_up(act, LANE)
    w3p = jnp.pad(w3, ((0, 0), (0, act_pad - act)))
    b3p = jnp.pad(b3, ((0, 0), (0, act_pad - act)))

    # Batch tiling: one big tile if the batch fits, else block_b-row tiles.
    if B <= block_b:
        tile_b = max(SUBLANE, _round_up(B, SUBLANE))
    else:
        tile_b = block_b
    B_pad = _round_up(B, tile_b)
    xp = jnp.pad(x, ((0, B_pad - B), (0, 0))) if B_pad != B else x

    # Optional bf16 MXU operands (v6e/v7x fast path); biases stay f32.
    mx_dt = jnp.bfloat16 if use_bf16 else jnp.float32
    w1m = w1f.astype(mx_dt)
    w2m = w2.astype(mx_dt)
    w3m = w3p.astype(mx_dt)

    fixed = lambda i: (0, 0)   # weights shared across all batch tiles

    out = pl.pallas_call(
        actor_kernel,
        out_shape=jax.ShapeDtypeStruct((B_pad, act_pad), jnp.float32),
        grid_spec=pltpu.PrefetchScalarGridSpec(
            num_scalar_prefetch=0,
            grid=(B_pad // tile_b,),
            in_specs=[
                pl.BlockSpec((tile_b, obs), lambda i: (i, 0)),   # x
                pl.BlockSpec((obs, hid1), fixed),                # W1 (LN folded)
                pl.BlockSpec((1, hid1), fixed),                  # b1 (LN folded)
                pl.BlockSpec((hid1, hid2), fixed),               # W2
                pl.BlockSpec((1, hid2), fixed),                  # b2
                pl.BlockSpec((hid2, act_pad), fixed),            # W3 (lane-padded)
                pl.BlockSpec((1, act_pad), fixed),               # b3 (lane-padded)
            ],
            out_specs=pl.BlockSpec((tile_b, act_pad), lambda i: (i, 0)),
        ),
        compiler_params=pltpu.CompilerParams(
            dimension_semantics=("parallel",)),
    )(xp, w1m, b1f, w2m, b2, w3m, b3p)

    return out[:B, :act]


def init_actor_params(key, obs_size, act_size, hid1, hid2):
    """Deterministic init mimicking torch defaults (U[-1/sqrt(fan_in), +])."""
    ks = jax.random.split(key, 6)

    def linear(kw, kb, fan_in, fan_out):
        bound = 1.0 / jnp.sqrt(fan_in)
        # Stored pre-transposed: [in, out]  (torch stores [out, in])
        w = jax.random.uniform(kw, (fan_in, fan_out), jnp.float32, -bound, bound)
        b = jax.random.uniform(kb, (1, fan_out), jnp.float32, -bound, bound)
        return w, b

    ln_g = jnp.ones((1, obs_size), jnp.float32)
    ln_b = jnp.zeros((1, obs_size), jnp.float32)
    w1, b1 = linear(ks[0], ks[1], obs_size, hid1)
    w2, b2 = linear(ks[2], ks[3], hid1, hid2)
    w3, b3 = linear(ks[4], ks[5], hid2, act_size)
    return (ln_g, ln_b, w1, b1, w2, b2, w3, b3)


def actor_reference(x, params):
    """Plain-JAX reference matching the PyTorch forward."""
    ln_g, ln_b, w1, b1, w2, b2, w3, b3 = params
    mean = jnp.mean(x, axis=-1, keepdims=True)
    var = jnp.mean(jnp.square(x - mean), axis=-1, keepdims=True)
    xn = (x - mean) / jnp.sqrt(var + LN_EPS) * ln_g + ln_b
    h1 = jnp.maximum(xn @ w1 + b1, 0.0)
    h2 = jnp.maximum(h1 @ w2 + b2, 0.0)
    return jnp.tanh(h2 @ w3 + b3)


if __name__ == "__main__":
    # Small shapes consistent with the module (hid1/hid2 = torch defaults);
    # batch=10 deliberately not a multiple of 8 to exercise the padding path.
    batch, obs_size, act_size = 10, 32, 8
    hid1, hid2 = 400, 300

    key = jax.random.PRNGKey(0)
    k_x, k_p = jax.random.split(key)
    x = jax.random.normal(k_x, (batch, obs_size), jnp.float32)
    params = init_actor_params(k_p, obs_size, act_size, hid1, hid2)

    ref = actor_reference(x, params)

    # f32 MXU-operand path: tight tolerance vs. the reference.
    out = jax.block_until_ready(actor_forward(x, params))
    assert out.shape == (batch, act_size)
    assert jnp.allclose(out, ref, atol=1e-5, rtol=1e-5), "f32 mismatch vs reference"

    # bf16 MXU-operand path (v6e/v7x peak matmul): looser tolerance.
    out_bf16 = jax.block_until_ready(actor_forward(x, params, use_bf16=True))
    assert out_bf16.shape == (batch, act_size)
    assert jnp.allclose(out_bf16, ref, atol=2e-2, rtol=2e-2), "bf16 mismatch vs reference"

    print("KERNEL_OK")
</pallas_src>

<mosaic_0001>
module attributes {stable_mosaic.version = 11 : i64} {
  func.func @actor_kernel(%arg0: i32, %arg1: memref<16x32xf32, #tpu.memory_space<vmem>>, %arg2: memref<32x400xf32, #tpu.memory_space<vmem>>, %arg3: memref<1x400xf32, #tpu.memory_space<vmem>>, %arg4: memref<400x300xf32, #tpu.memory_space<vmem>>, %arg5: memref<1x300xf32, #tpu.memory_space<vmem>>, %arg6: memref<300x128xf32, #tpu.memory_space<vmem>>, %arg7: memref<1x128xf32, #tpu.memory_space<vmem>>, %arg8: memref<16x128xf32, #tpu.memory_space<vmem>>) attributes {dimension_semantics = [#tpu.dimension_semantics<parallel>], iteration_bounds = array<i64: 1>, scalar_prefetch = 0 : i64, scratch_operands = 0 : i64, tpu.core_type = #tpu.core_type<tc>, window_params = [{transform_indices = @transform_0, window_bounds = array<i64: 16, 32>}, {pipeline_mode = #tpu.pipeline_mode<synchronous>, transform_indices = @transform_1, window_bounds = array<i64: 32, 400>}, {pipeline_mode = #tpu.pipeline_mode<synchronous>, transform_indices = @transform_2, window_bounds = array<i64: 1, 400>}, {pipeline_mode = #tpu.pipeline_mode<synchronous>, transform_indices = @transform_3, window_bounds = array<i64: 400, 300>}, {pipeline_mode = #tpu.pipeline_mode<synchronous>, transform_indices = @transform_4, window_bounds = array<i64: 1, 300>}, {pipeline_mode = #tpu.pipeline_mode<synchronous>, transform_indices = @transform_5, window_bounds = array<i64: 300, 128>}, {pipeline_mode = #tpu.pipeline_mode<synchronous>, transform_indices = @transform_6, window_bounds = array<i64: 1, 128>}, {transform_indices = @transform_7, window_bounds = array<i64: 16, 128>}]} {
    %c0 = arith.constant 0 : index
    %c0_0 = arith.constant 0 : index
    %0 = vector.load %arg1[%c0, %c0_0] : memref<16x32xf32, #tpu.memory_space<vmem>>, vector<16x32xf32>
    %cst = arith.constant dense<0.000000e+00> : vector<16xf32>
    %1 = vector.multi_reduction <add>, %0, %cst [1] : vector<16x32xf32> to vector<16xf32>
    %2 = vector.shape_cast %1 : vector<16xf32> to vector<16x1xf32>
    %cst_1 = arith.constant 3.200000e+01 : f32
    %3 = vector.broadcast %cst_1 : f32 to vector<16x1xf32>
    %4 = arith.divf %2, %3 : vector<16x1xf32>
    %5 = vector.broadcast %4 : vector<16x1xf32> to vector<16x32xf32>
    %6 = arith.subf %0, %5 : vector<16x32xf32>
    %7 = arith.mulf %6, %6 : vector<16x32xf32>
    %cst_2 = arith.constant dense<0.000000e+00> : vector<16xf32>
    %8 = vector.multi_reduction <add>, %7, %cst_2 [1] : vector<16x32xf32> to vector<16xf32>
    %9 = vector.shape_cast %8 : vector<16xf32> to vector<16x1xf32>
    %cst_3 = arith.constant 3.200000e+01 : f32
    %10 = vector.broadcast %cst_3 : f32 to vector<16x1xf32>
    %11 = arith.divf %9, %10 : vector<16x1xf32>
    %12 = vector.broadcast %4 : vector<16x1xf32> to vector<16x32xf32>
    %13 = arith.subf %0, %12 : vector<16x32xf32>
    %cst_4 = arith.constant 9.99999974E-6 : f32
    %14 = vector.broadcast %cst_4 : f32 to vector<16x1xf32>
    %15 = arith.addf %11, %14 : vector<16x1xf32>
    %16 = math.rsqrt %15 : vector<16x1xf32>
    %17 = vector.broadcast %16 : vector<16x1xf32> to vector<16x32xf32>
    %18 = arith.mulf %13, %17 : vector<16x32xf32>
    %c0_5 = arith.constant 0 : index
    %c0_6 = arith.constant 0 : index
    %19 = vector.load %arg2[%c0_5, %c0_6] : memref<32x400xf32, #tpu.memory_space<vmem>>, vector<32x400xf32>
    %cst_7 = arith.constant dense<0.000000e+00> : vector<16x400xf32>
    %20 = tpu.matmul %18, %19, %cst_7 {dimension_numbers = #tpu.dot_dimension_numbers<[1], [0], [0], [1], [0, 0, 1, 1], [], []>} : vector<16x32xf32>, vector<32x400xf32>, vector<16x400xf32> -> vector<16x400xf32>
    %c0_8 = arith.constant 0 : index
    %c0_9 = arith.constant 0 : index
    %21 = vector.load %arg3[%c0_8, %c0_9] : memref<1x400xf32, #tpu.memory_space<vmem>>, vector<1x400xf32>
    %22 = vector.broadcast %21 : vector<1x400xf32> to vector<16x400xf32>
    %23 = arith.addf %20, %22 : vector<16x400xf32>
    %cst_10 = arith.constant 0.000000e+00 : f32
    %24 = vector.broadcast %cst_10 : f32 to vector<16x400xf32>
    %25 = arith.maximumf %23, %24 : vector<16x400xf32>
    %c0_11 = arith.constant 0 : index
    %c0_12 = arith.constant 0 : index
    %26 = vector.load %arg4[%c0_11, %c0_12] : memref<400x300xf32, #tpu.memory_space<vmem>>, vector<400x300xf32>
    %cst_13 = arith.constant dense<0.000000e+00> : vector<16x300xf32>
    %27 = tpu.matmul %25, %26, %cst_13 {dimension_numbers = #tpu.dot_dimension_numbers<[1], [0], [0], [1], [0, 0, 1, 1], [], []>} : vector<16x400xf32>, vector<400x300xf32>, vector<16x300xf32> -> vector<16x300xf32>
    %c0_14 = arith.constant 0 : index
    %c0_15 = arith.constant 0 : index
    %28 = vector.load %arg5[%c0_14, %c0_15] : memref<1x300xf32, #tpu.memory_space<vmem>>, vector<1x300xf32>
    %29 = vector.broadcast %28 : vector<1x300xf32> to vector<16x300xf32>
    %30 = arith.addf %27, %29 : vector<16x300xf32>
    %cst_16 = arith.constant 0.000000e+00 : f32
    %31 = vector.broadcast %cst_16 : f32 to vector<16x300xf32>
    %32 = arith.maximumf %30, %31 : vector<16x300xf32>
    %c0_17 = arith.constant 0 : index
    %c0_18 = arith.constant 0 : index
    %33 = vector.load %arg6[%c0_17, %c0_18] : memref<300x128xf32, #tpu.memory_space<vmem>>, vector<300x128xf32>
    %cst_19 = arith.constant dense<0.000000e+00> : vector<16x128xf32>
    %34 = tpu.matmul %32, %33, %cst_19 {dimension_numbers = #tpu.dot_dimension_numbers<[1], [0], [0], [1], [0, 0, 1, 1], [], []>} : vector<16x300xf32>, vector<300x128xf32>, vector<16x128xf32> -> vector<16x128xf32>
    %c0_20 = arith.constant 0 : index
    %c0_21 = arith.constant 0 : index
    %35 = vector.load %arg7[%c0_20, %c0_21] : memref<1x128xf32, #tpu.memory_space<vmem>>, vector<1x128xf32>
    %36 = vector.broadcast %35 : vector<1x128xf32> to vector<16x128xf32>
    %37 = arith.addf %34, %36 : vector<16x128xf32>
    %38 = math.tanh %37 : vector<16x128xf32>
    %c0_22 = arith.constant 0 : index
    %c0_23 = arith.constant 0 : index
    %39 = vector.load %arg8[%c0_22, %c0_23] : memref<16x128xf32, #tpu.memory_space<vmem>>, vector<16x128xf32>
    tpu.vector_store %arg8[%c0_22, %c0_23], %38 {strides = array<i32>} : memref<16x128xf32, #tpu.memory_space<vmem>>, vector<16x128xf32>,
    return
  }
  func.func @transform_0(%arg0: i32) -> (i32, i32) {
    %c0_i32 = arith.constant 0 : i32
    %c0_i32_0 = arith.constant 0 : i32
    return %arg0, %c0_i32 : i32, i32
  }
  func.func @transform_1(%arg0: i32) -> (i32, i32) {
    %c0_i32 = arith.constant 0 : i32
    %c0_i32_0 = arith.constant 0 : i32
    %c0_i32_1 = arith.constant 0 : i32
    return %c0_i32, %c0_i32_0 : i32, i32
  }
  func.func @transform_2(%arg0: i32) -> (i32, i32) {
    %c0_i32 = arith.constant 0 : i32
    %c0_i32_0 = arith.constant 0 : i32
    %c0_i32_1 = arith.constant 0 : i32
    return %c0_i32, %c0_i32_0 : i32, i32
  }
  func.func @transform_3(%arg0: i32) -> (i32, i32) {
    %c0_i32 = arith.constant 0 : i32
    %c0_i32_0 = arith.constant 0 : i32
    %c0_i32_1 = arith.constant 0 : i32
    return %c0_i32, %c0_i32_0 : i32, i32
  }
  func.func @transform_4(%arg0: i32) -> (i32, i32) {
    %c0_i32 = arith.constant 0 : i32
    %c0_i32_0 = arith.constant 0 : i32
    %c0_i32_1 = arith.constant 0 : i32
    return %c0_i32, %c0_i32_0 : i32, i32
  }
  func.func @transform_5(%arg0: i32) -> (i32, i32) {
    %c0_i32 = arith.constant 0 : i32
    %c0_i32_0 = arith.constant 0 : i32
    %c0_i32_1 = arith.constant 0 : i32
    return %c0_i32, %c0_i32_0 : i32, i32
  }
  func.func @transform_6(%arg0: i32) -> (i32, i32) {
    %c0_i32 = arith.constant 0 : i32
    %c0_i32_0 = arith.constant 0 : i32
    %c0_i32_1 = arith.constant 0 : i32
    return %c0_i32, %c0_i32_0 : i32, i32
  }
  func.func @transform_7(%arg0: i32) -> (i32, i32) {
    %c0_i32 = arith.constant 0 : i32
    %c0_i32_0 = arith.constant 0 : i32
    return %arg0, %c0_i32 : i32, i32
  }
}

</mosaic_0001>

<llo_original>
// kernel: actor_forward.1
$region0: #{actor_forward.1}
  #allocation0 [shape = 'u32[]', space=smem, size = 0x4, offset = 0x4, fixed_abs, tag = 'smem constant byte address 0x4 - core index']
  #allocation1 [shape = 'u32[144,128]{1,0:T(1,128)}', space=vmem, size = 0x12000, scoped, tag = 'internal scratch']
  %s0 = inlined_call_operand.vmem [shape: f32[16,32], index: 0, kind: input, shape index: {}]
  %s1 = inlined_call_operand.vmem [shape: f32[32,400], index: 1, kind: input, shape index: {}]
  %s2 = inlined_call_operand.vmem [shape: f32[1,400], index: 2, kind: input, shape index: {}]
  %s3 = inlined_call_operand.vmem [shape: f32[400,300], index: 3, kind: input, shape index: {}]
  %s4 = inlined_call_operand.vmem [shape: f32[1,300], index: 4, kind: input, shape index: {}]
  %s5 = inlined_call_operand.vmem [shape: f32[300,128], index: 5, kind: input, shape index: {}]
  %s6 = inlined_call_operand.vmem [shape: f32[1,128], index: 6, kind: input, shape index: {}]
  %s7 = inlined_call_operand.vmem [shape: f32[16,128], index: 7, kind: output, shape index: {}]
  %s8 = sld [smem:[#allocation0]]
  $region38: #{actor_forward.1} parent=0
    _
  %s10 = ssub.s32 1, %s8
  %s11 = scalar_select 0, %s10, %s8
  // Predicated region
  $region2: #{actor_forward.1} parent=0 // pred_check
    _
  $region3: #{actor_forward.1} parent=0 // pred_check_branch
    %13 = sbr.rel (0) target = $region5
  $region4: #{actor_forward.1} parent=0 // pred_region
    _
  $region5: #{actor_forward.1} parent=0 // pred_fallthru
    _
  // Predicated region
  $region6: #{actor_forward.1} parent=0 // pred_check
    _
  $region7: #{actor_forward.1} parent=0 // pred_check_branch
    %15 = sbr.rel (0) target = $region9
  $region8: #{actor_forward.1} parent=0 // pred_region
    _
  $region9: #{actor_forward.1} parent=0 // pred_fallthru
    _
  // Predicated region
  $region10: #{actor_forward.1} parent=0 // pred_check
    _
  $region11: #{actor_forward.1} parent=0 // pred_check_branch
    %17 = sbr.rel (0) target = $region13
  $region12: #{actor_forward.1} parent=0 // pred_region
    _
  $region13: #{actor_forward.1} parent=0 // pred_fallthru
    _
  // Predicated region
  $region14: #{actor_forward.1} parent=0 // pred_check
    _
  $region15: #{actor_forward.1} parent=0 // pred_check_branch
    %19 = sbr.rel (0) target = $region17
  $region16: #{actor_forward.1} parent=0 // pred_region
    _
  $region17: #{actor_forward.1} parent=0 // pred_fallthru
    _
  // Predicated region
  $region18: #{actor_forward.1} parent=0 // pred_check
    _
  $region19: #{actor_forward.1} parent=0 // pred_check_branch
    %21 = sbr.rel (0) target = $region21
  $region20: #{actor_forward.1} parent=0 // pred_region
    _
  $region21: #{actor_forward.1} parent=0 // pred_fallthru
    _
  // Predicated region
  $region22: #{actor_forward.1} parent=0 // pred_check
    _
  $region23: #{actor_forward.1} parent=0 // pred_check_branch
    %23 = sbr.rel (0) target = $region25
  $region24: #{actor_forward.1} parent=0 // pred_region
    _
  $region25: #{actor_forward.1} parent=0 // pred_fallthru
    _
  // Predicated region
  $region26: #{actor_forward.1} parent=0 // pred_check
    _
  $region27: #{actor_forward.1} parent=0 // pred_check_branch
    %25 = sbr.rel (0) target = $region29
  $region28: #{actor_forward.1} parent=0 // pred_region
    _
  $region29: #{actor_forward.1} parent=0 // pred_fallthru
    _
  %v26 = vld [vmem:[%s0] sm:$0xff]
  %v27 = vld [vmem:[%s0 + $0x8] sm:$0xff]
  %vm28 = vcmask 261120
  %v29 = vsel %vm28, %v26, 0.0
  %30 = vadd.xlane.f32.xlu0 %v29
  %v31 = vpop.xlane.xlu0 %30
  %v32 = vsel %vm28, %v27, 0.0
  %33 = vadd.xlane.f32.xlu0 %v32
  %v34 = vpop.xlane.xlu0 %33
  %v35 = vrcp.pop 32.0
  %v36 = vmul.f32 %v31, %v35
  %v37 = vmul.f32 %v34, %v35
  %v38 = vsub.f32 %v26, %v36
  %v39 = vsub.f32 %v27, %v37
  %v40 = vmul.f32 %v38, %v38
  %v41 = vmul.f32 %v39, %v39
  %v42 = vsel %vm28, %v40, 0.0
  %43 = vadd.xlane.f32.xlu0 %v42
  %v44 = vpop.xlane.xlu0 %43
  %v45 = vsel %vm28, %v41, 0.0
  %46 = vadd.xlane.f32.xlu0 %v45
  %v47 = vpop.xlane.xlu0 %46
  %v48 = vmul.f32 %v44, %v35
  %v49 = vmul.f32 %v47, %v35
  %v50 = vadd.f32 %v48, 1e-05
  %v51 = vadd.f32 %v49, 1e-05
  %v52 = vrsqrt.pop %v50
  %v53 = vrsqrt.pop %v51
  %v54 = vmul.f32 %v38, %v52
  %v55 = vmul.f32 %v39, %v53
  %v56 = vld [vmem:[%s1] sm:$0xff]
  %v57 = vld [vmem:[%s1 + $0x8] sm:$0xff]
  %v58 = vld [vmem:[%s1 + $0x10] sm:$0xff]
  %v59 = vld [vmem:[%s1 + $0x18] sm:$0xff]
  %v60 = vld [vmem:[%s1 + $0x20] sm:$0xff]
  %v61 = vld [vmem:[%s1 + $0x28] sm:$0xff]
  %v62 = vld [vmem:[%s1 + $0x30] sm:$0xff]
  %v63 = vld [vmem:[%s1 + $0x38] sm:$0xff]
  %v64 = vld [vmem:[%s1 + $0x40] sm:$0xff]
  %v65 = vld [vmem:[%s1 + $0x48] sm:$0xff]
  %v66 = vld [vmem:[%s1 + $0x50] sm:$0xff]
  %v67 = vld [vmem:[%s1 + $0x58] sm:$0xff]
  %v68 = vld [vmem:[%s1 + $0x60] sm:$0xff]
  %v69 = vld [vmem:[%s1 + $0x68] sm:$0xff]
  %v70 = vld [vmem:[%s1 + $0x70] sm:$0xff]
  %v71 = vld [vmem:[%s1 + $0x78] sm:$0xff]
  %v72 = vld [vmem:[%s2] sm:$0xf]
  %v74 = vlaneseq
  %v75 = vshrl.u32 %v74, 7
  %v76 = vsub.s32 0, %v75
  %v77 = vrot.slane %v72, %v76
  %v78 = vlaneseq
  %v79 = vshrl.u32 %v78, 7
  %v80 = vsub.s32 1, %v79
  %v81 = vrot.slane %v72, %v80
  %v82 = vlaneseq
  %v83 = vshrl.u32 %v82, 7
  %v84 = vsub.s32 2, %v83
  %v85 = vrot.slane %v72, %v84
  %v86 = vlaneseq
  %v87 = vshrl.u32 %v86, 7
  %v88 = vsub.s32 3, %v87
  %v89 = vrot.slane %v72, %v88
  %v95 = vsel %vm28, %v54, 0
  %v98 = vsel %vm28, %v55, 0
  %100 = vmatprep.subr.mxu0 %v57
  %101 = vmatpush1.msra.mxu0 %v56
  %102 = vmatprep.subr.mxu0 %v61
  %103 = vmatpush1.msra.mxu0 %v60
  %104 = vmatprep.subr.mxu0 %v65
  %105 = vmatpush1.msra.mxu0 %v64
  %106 = vmatprep.subr.mxu0 %v69
  %107 = vmatpush1.msra.mxu0 %v68
  %108 = vmatprep.subr.mxu0 0.0
  %109 = vmatpush1.msra.mxu0 0.0
  %110 = vmatprep.subr.mxu0 0.0
  %111 = vmatpush1.msra.mxu0 0.0
  %112 = vmatprep.subr.mxu0 0.0
  %113 = vmatpush1.msra.mxu0 0.0
  %114 = vmatprep.subr.mxu0 0.0
  %115 = vmatpush1.msra.mxu0 0.0
  %116 = vmatprep.subr.mxu0 0.0
  %117 = vmatpush1.msra.mxu0 0.0
  %118 = vmatprep.subr.mxu0 0.0
  %119 = vmatpush1.msra.mxu0 0.0
  %120 = vmatprep.subr.mxu0 0.0
  %121 = vmatpush1.msra.mxu0 0.0
  %122 = vmatprep.subr.mxu0 0.0
  %123 = vmatpush1.msra.mxu0 0.0
  %124 = vmatprep.subr.mxu0 0.0
  %125 = vmatpush1.msra.mxu0 0.0
  %126 = vmatprep.subr.mxu0 0.0
  %127 = vmatpush1.msra.mxu0 0.0
  %128 = vmatprep.subr.mxu0 0.0
  %129 = vmatpush1.msra.mxu0 0.0
  %130 = vmatprep.subr.mxu0 0.0
  %131 = vmatpush1.msra.mxu0 0.0
  %132 = vmatprep.subr.mxu0 0.0
  %133 = vmatpush1.msra.mxu0 0.0
  %134 = vmatprep.subr.mxu0 0.0
  %135 = vmatpush1.msra.mxu0 0.0
  %136 = vmatprep.subr.mxu0 0.0
  %137 = vmatpush1.msra.mxu0 0.0
  %138 = vmatprep.subr.mxu0 0.0
  %139 = vmatpush1.msra.mxu0 0.0
  %140 = vmatprep.subr.mxu0 0.0
  %141 = vmatpush1.msra.mxu0 0.0
  %142 = vmatprep.subr.mxu0 0.0
  %143 = vmatpush1.msra.mxu0 0.0
  %144 = vmatprep.subr.mxu0 0.0
  %145 = vmatpush1.msra.mxu0 0.0
  %146 = vmatprep.subr.mxu0 0.0
  %147 = vmatpush1.msra.mxu0 0.0
  %148 = vmatprep.subr.mxu0 0.0
  %149 = vmatpush1.msra.mxu0 0.0
  %150 = vmatprep.subr.mxu0 0.0
  %151 = vmatpush1.msra.mxu0 0.0
  %152 = vmatprep.subr.mxu0 0.0
  %153 = vmatpush1.msra.mxu0 0.0
  %154 = vmatprep.subr.mxu0 0.0
  %155 = vmatpush1.msra.mxu0 0.0
  %156 = vmatprep.subr.mxu0 0.0
  %157 = vmatpush1.msra.mxu0 0.0
  %158 = vmatprep.subr.mxu0 0.0
  %159 = vmatpush1.msra.mxu0 0.0
  %160 = vmatprep.subr.mxu0 0.0
  %161 = vmatpush1.msra.mxu0 0.0
  %162 = vmatprep.subr.mxu0 0.0
  %163 = vmatpush1.msra.mxu0 0.0
  %164 = vmatprep.mubr.f32.mxu0 0.0
  %165 = vmatmul.mubr.f32.gmra.mrb[0].mxu0 %v95
  %v166 = vpop.f32.mrb[0].mxu0
  %v167 = vadd.f32 %v77, %v166
  %v168 = vpop.f32.mrb[0].mxu0
  %v169 = vadd.f32 %v81, %v168
  %170 = vmatprep.mubr.f32.mxu0 0.0
  %171 = vmatmul.mubr.f32.gmra.mrb[0].mxu0 %v98
  %v172 = vpop.f32.mrb[0].mxu0
  %v173 = vadd.f32 %v77, %v172
  %v174 = vpop.f32.mrb[0].mxu0
  %v175 = vadd.f32 %v81, %v174
  %176 = vdwg.mxu0
  %177 = vmatprep.subr.mxu0 %v59
  %178 = vmatpush1.msra.mxu0 %v58
  %179 = vmatprep.subr.mxu0 %v63
  %180 = vmatpush1.msra.mxu0 %v62
  %181 = vmatprep.subr.mxu0 %v67
  %182 = vmatpush1.msra.mxu0 %v66
  %183 = vmatprep.subr.mxu0 %v71
  %184 = vmatpush1.msra.mxu0 %v70
  %185 = vmatprep.subr.mxu0 0.0
  %186 = vmatpush1.msra.mxu0 0.0
  %187 = vmatprep.subr.mxu0 0.0
  %188 = vmatpush1.msra.mxu0 0.0
  %189 = vmatprep.subr.mxu0 0.0
  %190 = vmatpush1.msra.mxu0 0.0
  %191 = vmatprep.subr.mxu0 0.0
  %192 = vmatpush1.msra.mxu0 0.0
  %193 = vmatprep.subr.mxu0 0.0
  %194 = vmatpush1.msra.mxu0 0.0
  %195 = vmatprep.subr.mxu0 0.0
  %196 = vmatpush1.msra.mxu0 0.0
  %197 = vmatprep.subr.mxu0 0.0
  %198 = vmatpush1.msra.mxu0 0.0
  %199 = vmatprep.subr.mxu0 0.0
  %200 = vmatpush1.msra.mxu0 0.0
  %201 = vmatprep.subr.mxu0 0.0
  %202 = vmatpush1.msra.mxu0 0.0
  %203 = vmatprep.subr.mxu0 0.0
  %204 = vmatpush1.msra.mxu0 0.0
  %205 = vmatprep.subr.mxu0 0.0
  %206 = vmatpush1.msra.mxu0 0.0
  %207 = vmatprep.subr.mxu0 0.0
  %208 = vmatpush1.msra.mxu0 0.0
  %209 = vmatprep.subr.mxu0 0.0
  %210 = vmatpush1.msra.mxu0 0.0
  %211 = vmatprep.subr.mxu0 0.0
  %212 = vmatpush1.msra.mxu0 0.0
  %213 = vmatprep.subr.mxu0 0.0
  %214 = vmatpush1.msra.mxu0 0.0
  %215 = vmatprep.subr.mxu0 0.0
  %216 = vmatpush1.msra.mxu0 0.0
  %217 = vmatprep.subr.mxu0 0.0
  %218 = vmatpush1.msra.mxu0 0.0
  %219 = vmatprep.subr.mxu0 0.0
  %220 = vmatpush1.msra.mxu0 0.0
  %221 = vmatprep.subr.mxu0 0.0
  %222 = vmatpush1.msra.mxu0 0.0
  %223 = vmatprep.subr.mxu0 0.0
  %224 = vmatpush1.msra.mxu0 0.0
  %225 = vmatprep.subr.mxu0 0.0
  %226 = vmatpush1.msra.mxu0 0.0
  %227 = vmatprep.subr.mxu0 0.0
  %228 = vmatpush1.msra.mxu0 0.0
  %229 = vmatprep.subr.mxu0 0.0
  %230 = vmatpush1.msra.mxu0 0.0
  %231 = vmatprep.subr.mxu0 0.0
  %232 = vmatpush1.msra.mxu0 0.0
  %233 = vmatprep.subr.mxu0 0.0
  %234 = vmatpush1.msra.mxu0 0.0
  %235 = vmatprep.subr.mxu0 0.0
  %236 = vmatpush1.msra.mxu0 0.0
  %237 = vmatprep.subr.mxu0 0.0
  %238 = vmatpush1.msra.mxu0 0.0
  %239 = vmatprep.subr.mxu0 0.0
  %240 = vmatpush1.msra.mxu0 0.0
  %241 = vmatprep.mubr.f32.mxu0 0.0
  %242 = vmatmul.mubr.f32.gmra.mrb[0].mxu0 %v95
  %v243 = vpop.f32.mrb[0].mxu0
  %v244 = vadd.f32 %v85, %v243
  %v245 = vpop.f32.mrb[0].mxu0
  %v246 = vadd.f32 %v89, %v245
  %247 = vmatprep.mubr.f32.mxu0 0.0
  %248 = vmatmul.mubr.f32.gmra.mrb[0].mxu0 %v98
  %v249 = vpop.f32.mrb[0].mxu0
  %v250 = vadd.f32 %v85, %v249
  %v251 = vpop.f32.mrb[0].mxu0
  %v252 = vadd.f32 %v89, %v251
  %253 = vdwg.mxu0
  %v254 = vmax.f32 %v167, 0.0
  %v255 = vmax.f32 %v169, 0.0
  %v256 = vmax.f32 %v244, 0.0
  %v257 = vmax.f32 %v246, 0.0
  %v258 = vmax.f32 %v173, 0.0
  %v259 = vmax.f32 %v175, 0.0
  %v260 = vmax.f32 %v250, 0.0
  %v261 = vmax.f32 %v252, 0.0
  %v262 = vld [vmem:[%s3] sm:$0xff]
  %v263 = vld [vmem:[%s3 + $0x8] sm:$0xff]
  %v264 = vld [vmem:[%s3 + $0x10] sm:$0xff]
  %v265 = vld [vmem:[%s3 + $0x18] sm:$0xff]
  %v266 = vld [vmem:[%s3 + $0x20] sm:$0xff]
  %v267 = vld [vmem:[%s3 + $0x28] sm:$0xff]
  %v268 = vld [vmem:[%s3 + $0x30] sm:$0xff]
  %v269 = vld [vmem:[%s3 + $0x38] sm:$0xff]
  %v270 = vld [vmem:[%s3 + $0x40] sm:$0xff]
  %v271 = vld [vmem:[%s3 + $0x48] sm:$0xff]
  %v272 = vld [vmem:[%s3 + $0x50] sm:$0xff]
  %v273 = vld [vmem:[%s3 + $0x58] sm:$0xff]
  %v274 = vld [vmem:[%s3 + $0x60] sm:$0xff]
  %v275 = vld [vmem:[%s3 + $0x68] sm:$0xff]
  %v276 = vld [vmem:[%s3 + $0x70] sm:$0xff]
  %v277 = vld [vmem:[%s3 + $0x78] sm:$0xff]
  %v278 = vld [vmem:[%s3 + $0x80] sm:$0xff]
  %v279 = vld [vmem:[%s3 + $0x88] sm:$0xff]
  %v280 = vld [vmem:[%s3 + $0x90] sm:$0xff]
  %v281 = vld [vmem:[%s3 + $0x98] sm:$0xff]
  %v282 = vld [vmem:[%s3 + $0xa0] sm:$0xff]
  %v283 = vld [vmem:[%s3 + $0xa8] sm:$0xff]
  %v284 = vld [vmem:[%s3 + $0xb0] sm:$0xff]
  %v285 = vld [vmem:[%s3 + $0xb8] sm:$0xff]
  %v286 = vld [vmem:[%s3 + $0xc0] sm:$0xff]
  %v287 = vld [vmem:[%s3 + $0xc8] sm:$0xff]
  %v288 = vld [vmem:[%s3 + $0xd0] sm:$0xff]
  %v289 = vld [vmem:[%s3 + $0xd8] sm:$0xff]
  %v290 = vld [vmem:[%s3 + $0xe0] sm:$0xff]
  %v291 = vld [vmem:[%s3 + $0xe8] sm:$0xff]
  %v292 = vld [vmem:[%s3 + $0xf0] sm:$0xff]
  %v293 = vld [vmem:[%s3 + $0xf8] sm:$0xff]
  %v294 = vld [vmem:[%s3 + $0x100] sm:$0xff]
  %v295 = vld [vmem:[%s3 + $0x108] sm:$0xff]
  %v296 = vld [vmem:[%s3 + $0x110] sm:$0xff]
  %v297 = vld [vmem:[%s3 + $0x118] sm:$0xff]
  %v298 = vld [vmem:[%s3 + $0x120] sm:$0xff]
  %v299 = vld [vmem:[%s3 + $0x128] sm:$0xff]
  %v300 = vld [vmem:[%s3 + $0x130] sm:$0xff]
  %v301 = vld [vmem:[%s3 + $0x138] sm:$0xff]
  %v302 = vld [vmem:[%s3 + $0x140] sm:$0xff]
  %v303 = vld [vmem:[%s3 + $0x148] sm:$0xff]
  %v304 = vld [vmem:[%s3 + $0x150] sm:$0xff]
  %v305 = vld [vmem:[%s3 + $0x158] sm:$0xff]
  %v306 = vld [vmem:[%s3 + $0x160] sm:$0xff]
  %v307 = vld [vmem:[%s3 + $0x168] sm:$0xff]
  %v308 = vld [vmem:[%s3 + $0x170] sm:$0xff]
  %v309 = vld [vmem:[%s3 + $0x178] sm:$0xff]
  %v310 = vld [vmem:[%s3 + $0x180] sm:$0xff]
  %v311 = vld [vmem:[%s3 + $0x188] sm:$0xff]
  %v312 = vld [vmem:[%s3 + $0x190] sm:$0xff]
  %v313 = vld [vmem:[%s3 + $0x198] sm:$0xff]
  %v314 = vld [vmem:[%s3 + $0x1a0] sm:$0xff]
  %v315 = vld [vmem:[%s3 + $0x1a8] sm:$0xff]
  %v316 = vld [vmem:[%s3 + $0x1b0] sm:$0xff]
  %v317 = vld [vmem:[%s3 + $0x1b8] sm:$0xff]
  %v318 = vld [vmem:[%s3 + $0x1c0] sm:$0xff]
  %v319 = vld [vmem:[%s3 + $0x1c8] sm:$0xff]
  %v320 = vld [vmem:[%s3 + $0x1d0] sm:$0xff]
  %v321 = vld [vmem:[%s3 + $0x1d8] sm:$0xff]
  %v322 = vld [vmem:[%s3 + $0x1e0] sm:$0xff]
  %v323 = vld [vmem:[%s3 + $0x1e8] sm:$0xff]
  %v324 = vld [vmem:[%s3 + $0x1f0] sm:$0xff]
  %v325 = vld [vmem:[%s3 + $0x1f8] sm:$0xff]
  %v326 = vld [vmem:[%s3 + $0x200] sm:$0xff]
  %v327 = vld [vmem:[%s3 + $0x208] sm:$0xff]
  %v328 = vld [vmem:[%s3 + $0x210] sm:$0xff]
  %v329 = vld [vmem:[%s3 + $0x218] sm:$0xff]
  %v330 = vld [vmem:[%s3 + $0x220] sm:$0xff]
  %v331 = vld [vmem:[%s3 + $0x228] sm:$0xff]
  %v332 = vld [vmem:[%s3 + $0x230] sm:$0xff]
  %v333 = vld [vmem:[%s3 + $0x238] sm:$0xff]
  %v334 = vld [vmem:[%s3 + $0x240] sm:$0xff]
  %v335 = vld [vmem:[%s3 + $0x248] sm:$0xff]
  %v336 = vld [vmem:[%s3 + $0x250] sm:$0xff]
  %v337 = vld [vmem:[%s3 + $0x258] sm:$0xff]
  %v338 = vld [vmem:[%s3 + $0x260] sm:$0xff]
  %v339 = vld [vmem:[%s3 + $0x268] sm:$0xff]
  %v340 = vld [vmem:[%s3 + $0x270] sm:$0xff]
  %v341 = vld [vmem:[%s3 + $0x278] sm:$0xff]
  %v342 = vld [vmem:[%s3 + $0x280] sm:$0xff]
  %v343 = vld [vmem:[%s3 + $0x288] sm:$0xff]
  %v344 = vld [vmem:[%s3 + $0x290] sm:$0xff]
  %v345 = vld [vmem:[%s3 + $0x298] sm:$0xff]
  %v346 = vld [vmem:[%s3 + $0x2a0] sm:$0xff]
  %v347 = vld [vmem:[%s3 + $0x2a8] sm:$0xff]
  %v348 = vld [vmem:[%s3 + $0x2b0] sm:$0xff]
  %v349 = vld [vmem:[%s3 + $0x2b8] sm:$0xff]
  %v350 = vld [vmem:[%s3 + $0x2c0] sm:$0xff]
  %v351 = vld [vmem:[%s3 + $0x2c8] sm:$0xff]
  %v352 = vld [vmem:[%s3 + $0x2d0] sm:$0xff]
  %v353 = vld [vmem:[%s3 + $0x2d8] sm:$0xff]
  %v354 = vld [vmem:[%s3 + $0x2e0] sm:$0xff]
  %v355 = vld [vmem:[%s3 + $0x2e8] sm:$0xff]
  %v356 = vld [vmem:[%s3 + $0x2f0] sm:$0xff]
  %v357 = vld [vmem:[%s3 + $0x2f8] sm:$0xff]
  %v358 = vld [vmem:[%s3 + $0x300] sm:$0xff]
  %v359 = vld [vmem:[%s3 + $0x308] sm:$0xff]
  %v360 = vld [vmem:[%s3 + $0x310] sm:$0xff]
  %v361 = vld [vmem:[%s3 + $0x318] sm:$0xff]
  %v362 = vld [vmem:[%s3 + $0x320] sm:$0xff]
  %v363 = vld [vmem:[%s3 + $0x328] sm:$0xff]
  %v364 = vld [vmem:[%s3 + $0x330] sm:$0xff]
  %v365 = vld [vmem:[%s3 + $0x338] sm:$0xff]
  %v366 = vld [vmem:[%s3 + $0x340] sm:$0xff]
  %v367 = vld [vmem:[%s3 + $0x348] sm:$0xff]
  %v368 = vld [vmem:[%s3 + $0x350] sm:$0xff]
  %v369 = vld [vmem:[%s3 + $0x358] sm:$0xff]
  %v370 = vld [vmem:[%s3 + $0x360] sm:$0xff]
  %v371 = vld [vmem:[%s3 + $0x368] sm:$0xff]
  %v372 = vld [vmem:[%s3 + $0x370] sm:$0xff]
  %v373 = vld [vmem:[%s3 + $0x378] sm:$0xff]
  %v374 = vld [vmem:[%s3 + $0x380] sm:$0xff]
  %v375 = vld [vmem:[%s3 + $0x388] sm:$0xff]
  %v376 = vld [vmem:[%s3 + $0x390] sm:$0xff]
  %v377 = vld [vmem:[%s3 + $0x398] sm:$0xff]
  %v378 = vld [vmem:[%s3 + $0x3a0] sm:$0xff]
  %v379 = vld [vmem:[%s3 + $0x3a8] sm:$0xff]
  %v380 = vld [vmem:[%s3 + $0x3b0] sm:$0xff]
  %v381 = vld [vmem:[%s3 + $0x3b8] sm:$0xff]
  %v382 = vld [vmem:[%s3 + $0x3c0] sm:$0xff]
  %v383 = vld [vmem:[%s3 + $0x3c8] sm:$0xff]
  %v384 = vld [vmem:[%s3 + $0x3d0] sm:$0xff]
  %v385 = vld [vmem:[%s3 + $0x3d8] sm:$0xff]
  %v386 = vld [vmem:[%s3 + $0x3e0] sm:$0xff]
  %v387 = vld [vmem:[%s3 + $0x3e8] sm:$0xff]
  %v388 = vld [vmem:[%s3 + $0x3f0] sm:$0xff]
  %v389 = vld [vmem:[%s3 + $0x3f8] sm:$0xff]
  %v390 = vld [vmem:[%s3 + $0x400] sm:$0xff]
  %v391 = vld [vmem:[%s3 + $0x408] sm:$0xff]
  %v392 = vld [vmem:[%s3 + $0x410] sm:$0xff]
  %v393 = vld [vmem:[%s3 + $0x418] sm:$0xff]
  %v394 = vld [vmem:[%s3 + $0x420] sm:$0xff]
  %v395 = vld [vmem:[%s3 + $0x428] sm:$0xff]
  %v396 = vld [vmem:[%s3 + $0x430] sm:$0xff]
  %v397 = vld [vmem:[%s3 + $0x438] sm:$0xff]
  %v398 = vld [vmem:[%s3 + $0x440] sm:$0xff]
  %v399 = vld [vmem:[%s3 + $0x448] sm:$0xff]
  %v400 = vld [vmem:[%s3 + $0x450] sm:$0xff]
  %v401 = vld [vmem:[%s3 + $0x458] sm:$0xff]
  %v402 = vld [vmem:[%s3 + $0x460] sm:$0xff]
  %v403 = vld [vmem:[%s3 + $0x468] sm:$0xff]
  %v404 = vld [vmem:[%s3 + $0x470] sm:$0xff]
  %v405 = vld [vmem:[%s3 + $0x478] sm:$0xff]
  %v406 = vld [vmem:[%s3 + $0x480] sm:$0xff]
  %v407 = vld [vmem:[%s3 + $0x488] sm:$0xff]
  %v408 = vld [vmem:[%s3 + $0x490] sm:$0xff]
  %v409 = vld [vmem:[%s3 + $0x498] sm:$0xff]
  %v410 = vld [vmem:[%s3 + $0x4a0] sm:$0xff]
  %v411 = vld [vmem:[%s3 + $0x4a8] sm:$0xff]
  %v412 = vld [vmem:[%s4] sm:$0x7]
  %v414 = vlaneseq
  %v415 = vshrl.u32 %v414, 7
  %v416 = vsub.s32 0, %v415
  %v417 = vrot.slane %v412, %v416
  %v418 = vlaneseq
  %v419 = vshrl.u32 %v418, 7
  %v420 = vsub.s32 1, %v419
  %v421 = vrot.slane %v412, %v420
  %v422 = vlaneseq
  %v423 = vshrl.u32 %v422, 7
  %v424 = vsub.s32 2, %v423
  %v425 = vrot.slane %v412, %v424
  %vm429 = vcmask 130048
  %v431 = vsel %vm429, %v257, 0
  %v434 = vsel %vm429, %v261, 0
  %436 = vmatprep.subr.mxu0 %v263
  %437 = vmatpush1.msra.mxu0 %v262
  %438 = vmatprep.subr.mxu0 %v266
  %439 = vmatpush1.msra.mxu0 %v265
  %440 = vmatprep.subr.mxu0 %v269
  %441 = vmatpush1.msra.mxu0 %v268
  %442 = vmatprep.subr.mxu0 %v272
  %443 = vmatpush1.msra.mxu0 %v271
  %444 = vmatprep.subr.mxu0 %v275
  %445 = vmatpush1.msra.mxu0 %v274
  %446 = vmatprep.subr.mxu0 %v278
  %447 = vmatpush1.msra.mxu0 %v277
  %448 = vmatprep.subr.mxu0 %v281
  %449 = vmatpush1.msra.mxu0 %v280
  %450 = vmatprep.subr.mxu0 %v284
  %451 = vmatpush1.msra.mxu0 %v283
  %452 = vmatprep.subr.mxu0 %v287
  %453 = vmatpush1.msra.mxu0 %v286
  %454 = vmatprep.subr.mxu0 %v290
  %455 = vmatpush1.msra.mxu0 %v289
  %456 = vmatprep.subr.mxu0 %v293
  %457 = vmatpush1.msra.mxu0 %v292
  %458 = vmatprep.subr.mxu0 %v296
  %459 = vmatpush1.msra.mxu0 %v295
  %460 = vmatprep.subr.mxu0 %v299
  %461 = vmatpush1.msra.mxu0 %v298
  %462 = vmatprep.subr.mxu0 %v302
  %463 = vmatpush1.msra.mxu0 %v301
  %464 = vmatprep.subr.mxu0 %v305
  %465 = vmatpush1.msra.mxu0 %v304
  %466 = vmatprep.subr.mxu0 %v308
  %467 = vmatpush1.msra.mxu0 %v307
  %468 = vmatprep.subr.mxu0 %v311
  %469 = vmatpush1.msra.mxu0 %v310
  %470 = vmatprep.subr.mxu0 %v314
  %471 = vmatpush1.msra.mxu0 %v313
  %472 = vmatprep.subr.mxu0 %v317
  %473 = vmatpush1.msra.mxu0 %v316
  %474 = vmatprep.subr.mxu0 %v320
  %475 = vmatpush1.msra.mxu0 %v319
  %476 = vmatprep.subr.mxu0 %v323
  %477 = vmatpush1.msra.mxu0 %v322
  %478 = vmatprep.subr.mxu0 %v326
  %479 = vmatpush1.msra.mxu0 %v325
  %480 = vmatprep.subr.mxu0 %v329
  %481 = vmatpush1.msra.mxu0 %v328
  %482 = vmatprep.subr.mxu0 %v332
  %483 = vmatpush1.msra.mxu0 %v331
  %484 = vmatprep.subr.mxu0 %v335
  %485 = vmatpush1.msra.mxu0 %v334
  %486 = vmatprep.subr.mxu0 %v338
  %487 = vmatpush1.msra.mxu0 %v337
  %488 = vmatprep.subr.mxu0 %v341
  %489 = vmatpush1.msra.mxu0 %v340
  %490 = vmatprep.subr.mxu0 %v344
  %491 = vmatpush1.msra.mxu0 %v343
  %492 = vmatprep.subr.mxu0 %v347
  %493 = vmatpush1.msra.mxu0 %v346
  %494 = vmatprep.subr.mxu0 %v350
  %495 = vmatpush1.msra.mxu0 %v349
  %496 = vmatprep.subr.mxu0 %v353
  %497 = vmatpush1.msra.mxu0 %v352
  %498 = vmatprep.subr.mxu0 %v356
  %499 = vmatpush1.msra.mxu0 %v355
  %500 = vmatprep.mubr.f32.mxu0 %v255
  %501 = vmatmul.mubr.f32.gmra.mrb[0].mxu0 %v254
  %v502 = vpop.f32.mrb[0].mxu0
  %v503 = vadd.f32 %v417, %v502
  %v504 = vpop.f32.mrb[0].mxu0
  %v505 = vadd.f32 %v421, %v504
  %506 = vmatprep.mubr.f32.mxu0 %v259
  %507 = vmatmul.mubr.f32.gmra.mrb[0].mxu0 %v258
  %v508 = vpop.f32.mrb[0].mxu0
  %v509 = vadd.f32 %v417, %v508
  %v510 = vpop.f32.mrb[0].mxu0
  %v511 = vadd.f32 %v421, %v510
  %512 = vdwg.mxu0
  %513 = vmatprep.subr.mxu0 %v359
  %514 = vmatpush1.msra.mxu0 %v358
  %515 = vmatprep.subr.mxu0 %v362
  %516 = vmatpush1.msra.mxu0 %v361
  %517 = vmatprep.subr.mxu0 %v365
  %518 = vmatpush1.msra.mxu0 %v364
  %519 = vmatprep.subr.mxu0 %v368
  %520 = vmatpush1.msra.mxu0 %v367
  %521 = vmatprep.subr.mxu0 %v371
  %522 = vmatpush1.msra.mxu0 %v370
  %523 = vmatprep.subr.mxu0 %v374
  %524 = vmatpush1.msra.mxu0 %v373
  %525 = vmatprep.subr.mxu0 %v377
  %526 = vmatpush1.msra.mxu0 %v376
  %527 = vmatprep.subr.mxu0 %v380
  %528 = vmatpush1.msra.mxu0 %v379
  %529 = vmatprep.subr.mxu0 %v383
  %530 = vmatpush1.msra.mxu0 %v382
  %531 = vmatprep.subr.mxu0 %v386
  %532 = vmatpush1.msra.mxu0 %v385
  %533 = vmatprep.subr.mxu0 %v389
  %534 = vmatpush1.msra.mxu0 %v388
  %535 = vmatprep.subr.mxu0 %v392
  %536 = vmatpush1.msra.mxu0 %v391
  %537 = vmatprep.subr.mxu0 %v395
  %538 = vmatpush1.msra.mxu0 %v394
  %539 = vmatprep.subr.mxu0 %v398
  %540 = vmatpush1.msra.mxu0 %v397
  %541 = vmatprep.subr.mxu0 %v401
  %542 = vmatpush1.msra.mxu0 %v400
  %543 = vmatprep.subr.mxu0 %v404
  %544 = vmatpush1.msra.mxu0 %v403
  %545 = vmatprep.subr.mxu0 %v407
  %546 = vmatpush1.msra.mxu0 %v406
  %547 = vmatprep.subr.mxu0 %v410
  %548 = vmatpush1.msra.mxu0 %v409
  %549 = vmatprep.subr.mxu0 0.0
  %550 = vmatpush1.msra.mxu0 0.0
  %551 = vmatprep.subr.mxu0 0.0
  %552 = vmatpush1.msra.mxu0 0.0
  %553 = vmatprep.subr.mxu0 0.0
  %554 = vmatpush1.msra.mxu0 0.0
  %555 = vmatprep.subr.mxu0 0.0
  %556 = vmatpush1.msra.mxu0 0.0
  %557 = vmatprep.subr.mxu0 0.0
  %558 = vmatpush1.msra.mxu0 0.0
  %559 = vmatprep.subr.mxu0 0.0
  %560 = vmatpush1.msra.mxu0 0.0
  %561 = vmatprep.subr.mxu0 0.0
  %562 = vmatpush1.msra.mxu0 0.0
  %563 = vmatprep.subr.mxu0 0.0
  %564 = vmatpush1.msra.mxu0 0.0
  %565 = vmatprep.subr.mxu0 0.0
  %566 = vmatpush1.msra.mxu0 0.0
  %567 = vmatprep.subr.mxu0 0.0
  %568 = vmatpush1.msra.mxu0 0.0
  %569 = vmatprep.subr.mxu0 0.0
  %570 = vmatpush1.msra.mxu0 0.0
  %571 = vmatprep.subr.mxu0 0.0
  %572 = vmatpush1.msra.mxu0 0.0
  %573 = vmatprep.subr.mxu0 0.0
  %574 = vmatpush1.msra.mxu0 0.0
  %575 = vmatprep.subr.mxu0 0.0
  %576 = vmatpush1.msra.mxu0 0.0
  %577 = vmatprep.mubr.f32.mxu0 %v431
  %578 = vmatmul.mubr.f32.gmra.mrb[0].mxu0 %v256
  %v579 = vpop.f32.mrb[0].mxu0
  %v580 = vadd.f32 %v503, %v579
  %v581 = vpop.f32.mrb[0].mxu0
  %v582 = vadd.f32 %v505, %v581
  %583 = vmatprep.mubr.f32.mxu0 %v434
  %584 = vmatmul.mubr.f32.gmra.mrb[0].mxu0 %v260
  %v585 = vpop.f32.mrb[0].mxu0
  %v586 = vadd.f32 %v509, %v585
  %v587 = vpop.f32.mrb[0].mxu0
  %v588 = vadd.f32 %v511, %v587
  %589 = vdwg.mxu0
  %590 = vmatprep.subr.mxu0 0.0
  %591 = vmatpush1.msra.mxu0 %v264
  %592 = vmatprep.subr.mxu0 0.0
  %593 = vmatpush1.msra.mxu0 %v267
  %594 = vmatprep.subr.mxu0 0.0
  %595 = vmatpush1.msra.mxu0 %v270
  %596 = vmatprep.subr.mxu0 0.0
  %597 = vmatpush1.msra.mxu0 %v273
  %598 = vmatprep.subr.mxu0 0.0
  %599 = vmatpush1.msra.mxu0 %v276
  %600 = vmatprep.subr.mxu0 0.0
  %601 = vmatpush1.msra.mxu0 %v279
  %602 = vmatprep.subr.mxu0 0.0
  %603 = vmatpush1.msra.mxu0 %v282
  %604 = vmatprep.subr.mxu0 0.0
  %605 = vmatpush1.msra.mxu0 %v285
  %606 = vmatprep.subr.mxu0 0.0
  %607 = vmatpush1.msra.mxu0 %v288
  %608 = vmatprep.subr.mxu0 0.0
  %609 = vmatpush1.msra.mxu0 %v291
  %610 = vmatprep.subr.mxu0 0.0
  %611 = vmatpush1.msra.mxu0 %v294
  %612 = vmatprep.subr.mxu0 0.0
  %613 = vmatpush1.msra.mxu0 %v297
  %614 = vmatprep.subr.mxu0 0.0
  %615 = vmatpush1.msra.mxu0 %v300
  %616 = vmatprep.subr.mxu0 0.0
  %617 = vmatpush1.msra.mxu0 %v303
  %618 = vmatprep.subr.mxu0 0.0
  %619 = vmatpush1.msra.mxu0 %v306
  %620 = vmatprep.subr.mxu0 0.0
  %621 = vmatpush1.msra.mxu0 %v309
  %622 = vmatprep.subr.mxu0 0.0
  %623 = vmatpush1.msra.mxu0 %v312
  %624 = vmatprep.subr.mxu0 0.0
  %625 = vmatpush1.msra.mxu0 %v315
  %626 = vmatprep.subr.mxu0 0.0
  %627 = vmatpush1.msra.mxu0 %v318
  %628 = vmatprep.subr.mxu0 0.0
  %629 = vmatpush1.msra.mxu0 %v321
  %630 = vmatprep.subr.mxu0 0.0
  %631 = vmatpush1.msra.mxu0 %v324
  %632 = vmatprep.subr.mxu0 0.0
  %633 = vmatpush1.msra.mxu0 %v327
  %634 = vmatprep.subr.mxu0 0.0
  %635 = vmatpush1.msra.mxu0 %v330
  %636 = vmatprep.subr.mxu0 0.0
  %637 = vmatpush1.msra.mxu0 %v333
  %638 = vmatprep.subr.mxu0 0.0
  %639 = vmatpush1.msra.mxu0 %v336
  %640 = vmatprep.subr.mxu0 0.0
  %641 = vmatpush1.msra.mxu0 %v339
  %642 = vmatprep.subr.mxu0 0.0
  %643 = vmatpush1.msra.mxu0 %v342
  %644 = vmatprep.subr.mxu0 0.0
  %645 = vmatpush1.msra.mxu0 %v345
  %646 = vmatprep.subr.mxu0 0.0
  %647 = vmatpush1.msra.mxu0 %v348
  %648 = vmatprep.subr.mxu0 0.0
  %649 = vmatpush1.msra.mxu0 %v351
  %650 = vmatprep.subr.mxu0 0.0
  %651 = vmatpush1.msra.mxu0 %v354
  %652 = vmatprep.subr.mxu0 0.0
  %653 = vmatpush1.msra.mxu0 %v357
  %654 = vmatprep.mubr.f32.mxu0 %v255
  %655 = vmatmul.mubr.f32.gmra.mrb[0].mxu0 %v254
  %v656 = vpop.f32.mrb[0].mxu0
  %v657 = vadd.f32 %v425, %v656
  %v658 = vpop.f32.mrb[0].mxu0
  %659 = vmatprep.mubr.f32.mxu0 %v259
  %660 = vmatmul.mubr.f32.gmra.mrb[0].mxu0 %v258
  %v661 = vpop.f32.mrb[0].mxu0
  %v662 = vadd.f32 %v425, %v661
  %v663 = vpop.f32.mrb[0].mxu0
  %664 = vdwg.mxu0
  %665 = vmatprep.subr.mxu0 0.0
  %666 = vmatpush1.msra.mxu0 %v360
  %667 = vmatprep.subr.mxu0 0.0
  %668 = vmatpush1.msra.mxu0 %v363
  %669 = vmatprep.subr.mxu0 0.0
  %670 = vmatpush1.msra.mxu0 %v366
  %671 = vmatprep.subr.mxu0 0.0
  %672 = vmatpush1.msra.mxu0 %v369
  %673 = vmatprep.subr.mxu0 0.0
  %674 = vmatpush1.msra.mxu0 %v372
  %675 = vmatprep.subr.mxu0 0.0
  %676 = vmatpush1.msra.mxu0 %v375
  %677 = vmatprep.subr.mxu0 0.0
  %678 = vmatpush1.msra.mxu0 %v378
  %679 = vmatprep.subr.mxu0 0.0
  %680 = vmatpush1.msra.mxu0 %v381
  %681 = vmatprep.subr.mxu0 0.0
  %682 = vmatpush1.msra.mxu0 %v384
  %683 = vmatprep.subr.mxu0 0.0
  %684 = vmatpush1.msra.mxu0 %v387
  %685 = vmatprep.subr.mxu0 0.0
  %686 = vmatpush1.msra.mxu0 %v390
  %687 = vmatprep.subr.mxu0 0.0
  %688 = vmatpush1.msra.mxu0 %v393
  %689 = vmatprep.subr.mxu0 0.0
  %690 = vmatpush1.msra.mxu0 %v396
  %691 = vmatprep.subr.mxu0 0.0
  %692 = vmatpush1.msra.mxu0 %v399
  %693 = vmatprep.subr.mxu0 0.0
  %694 = vmatpush1.msra.mxu0 %v402
  %695 = vmatprep.subr.mxu0 0.0
  %696 = vmatpush1.msra.mxu0 %v405
  %697 = vmatprep.subr.mxu0 0.0
  %698 = vmatpush1.msra.mxu0 %v408
  %699 = vmatprep.subr.mxu0 0.0
  %700 = vmatpush1.msra.mxu0 %v411
  %701 = vmatprep.subr.mxu0 0.0
  %702 = vmatpush1.msra.mxu0 0.0
  %703 = vmatprep.subr.mxu0 0.0
  %704 = vmatpush1.msra.mxu0 0.0
  %705 = vmatprep.subr.mxu0 0.0
  %706 = vmatpush1.msra.mxu0 0.0
  %707 = vmatprep.subr.mxu0 0.0
  %708 = vmatpush1.msra.mxu0 0.0
  %709 = vmatprep.subr.mxu0 0.0
  %710 = vmatpush1.msra.mxu0 0.0
  %711 = vmatprep.subr.mxu0 0.0
  %712 = vmatpush1.msra.mxu0 0.0
  %713 = vmatprep.subr.mxu0 0.0
  %714 = vmatpush1.msra.mxu0 0.0
  %715 = vmatprep.subr.mxu0 0.0
  %716 = vmatpush1.msra.mxu0 0.0
  %717 = vmatprep.subr.mxu0 0.0
  %718 = vmatpush1.msra.mxu0 0.0
  %719 = vmatprep.subr.mxu0 0.0
  %720 = vmatpush1.msra.mxu0 0.0
  %721 = vmatprep.subr.mxu0 0.0
  %722 = vmatpush1.msra.mxu0 0.0
  %723 = vmatprep.subr.mxu0 0.0
  %724 = vmatpush1.msra.mxu0 0.0
  %725 = vmatprep.subr.mxu0 0.0
  %726 = vmatpush1.msra.mxu0 0.0
  %727 = vmatprep.subr.mxu0 0.0
  %728 = vmatpush1.msra.mxu0 0.0
  %729 = vmatprep.mubr.f32.mxu0 %v431
  %730 = vmatmul.mubr.f32.gmra.mrb[0].mxu0 %v256
  %v731 = vpop.f32.mrb[0].mxu0
  %v732 = vadd.f32 %v657, %v731
  %v733 = vpop.f32.mrb[0].mxu0
  %734 = vmatprep.mubr.f32.mxu0 %v434
  %735 = vmatmul.mubr.f32.gmra.mrb[0].mxu0 %v260
  %v736 = vpop.f32.mrb[0].mxu0
  %v737 = vadd.f32 %v662, %v736
  %v738 = vpop.f32.mrb[0].mxu0
  %739 = vdwg.mxu0
  %v740 = vmax.f32 %v580, 0.0
  %v741 = vmax.f32 %v582, 0.0
  %v742 = vmax.f32 %v732, 0.0
  %v743 = vmax.f32 %v586, 0.0
  %v744 = vmax.f32 %v588, 0.0
  %v745 = vmax.f32 %v737, 0.0
  %v746 = vld [vmem:[%s5] sm:$0xff]
  %v747 = vld [vmem:[%s5 + $0x8] sm:$0xff]
  %v748 = vld [vmem:[%s5 + $0x10] sm:$0xff]
  %v749 = vld [vmem:[%s5 + $0x18] sm:$0xff]
  %v750 = vld [vmem:[%s5 + $0x20] sm:$0xff]
  %v751 = vld [vmem:[%s5 + $0x28] sm:$0xff]
  %v752 = vld [vmem:[%s5 + $0x30] sm:$0xff]
  %v753 = vld [vmem:[%s5 + $0x38] sm:$0xff]
  %v754 = vld [vmem:[%s5 + $0x40] sm:$0xff]
  %v755 = vld [vmem:[%s5 + $0x48] sm:$0xff]
  %v756 = vld [vmem:[%s5 + $0x50] sm:$0xff]
  %v757 = vld [vmem:[%s5 + $0x58] sm:$0xff]
  %v758 = vld [vmem:[%s5 + $0x60] sm:$0xff]
  %v759 = vld [vmem:[%s5 + $0x68] sm:$0xff]
  %v760 = vld [vmem:[%s5 + $0x70] sm:$0xff]
  %v761 = vld [vmem:[%s5 + $0x78] sm:$0xff]
  %v762 = vld [vmem:[%s5 + $0x80] sm:$0xff]
  %v763 = vld [vmem:[%s5 + $0x88] sm:$0xff]
  %v764 = vld [vmem:[%s5 + $0x90] sm:$0xff]
  %v765 = vld [vmem:[%s5 + $0x98] sm:$0xff]
  %v766 = vld [vmem:[%s5 + $0xa0] sm:$0xff]
  %v767 = vld [vmem:[%s5 + $0xa8] sm:$0xff]
  %v768 = vld [vmem:[%s5 + $0xb0] sm:$0xff]
  %v769 = vld [vmem:[%s5 + $0xb8] sm:$0xff]
  %v770 = vld [vmem:[%s5 + $0xc0] sm:$0xff]
  %v771 = vld [vmem:[%s5 + $0xc8] sm:$0xff]
  %v772 = vld [vmem:[%s5 + $0xd0] sm:$0xff]
  %v773 = vld [vmem:[%s5 + $0xd8] sm:$0xff]
  %v774 = vld [vmem:[%s5 + $0xe0] sm:$0xff]
  %v775 = vld [vmem:[%s5 + $0xe8] sm:$0xff]
  %v776 = vld [vmem:[%s5 + $0xf0] sm:$0xff]
  %v777 = vld [vmem:[%s5 + $0xf8] sm:$0xff]
  %v778 = vld [vmem:[%s5 + $0x100] sm:$0xff]
  %v779 = vld [vmem:[%s5 + $0x108] sm:$0xff]
  %v780 = vld [vmem:[%s5 + $0x110] sm:$0xff]
  %v781 = vld [vmem:[%s5 + $0x118] sm:$0xff]
  %v782 = vld [vmem:[%s5 + $0x120] sm:$0xff]
  %v783 = vld [vmem:[%s5 + $0x128] sm:$0xf]
  %v784 = vld [vmem:[%s6] sm:$0x1]
  %v786 = vlaneseq
  %v787 = vshrl.u32 %v786, 7
  %v788 = vsub.s32 0, %v787
  %v789 = vrot.slane %v784, %v788
  %vm791 = vcmask 359424
  %v793 = vsel %vm791, %v742, 0
  %v796 = vsel %vm791, %v745, 0
  %vm798 = vcmask 1043456
  %v800 = vsel %vm798, %v783, 0
  %802 = vmatprep.subr.mxu0 0.0
  %803 = vmatpush1.msra.mxu0 %v746
  %804 = vmatprep.subr.mxu0 0.0
  %805 = vmatpush1.msra.mxu0 %v747
  %806 = vmatprep.subr.mxu0 0.0
  %807 = vmatpush1.msra.mxu0 %v748
  %808 = vmatprep.subr.mxu0 0.0
  %809 = vmatpush1.msra.mxu0 %v749
  %810 = vmatprep.subr.mxu0 0.0
  %811 = vmatpush1.msra.mxu0 %v750
  %812 = vmatprep.subr.mxu0 0.0
  %813 = vmatpush1.msra.mxu0 %v751
  %814 = vmatprep.subr.mxu0 0.0
  %815 = vmatpush1.msra.mxu0 %v752
  %816 = vmatprep.subr.mxu0 0.0
  %817 = vmatpush1.msra.mxu0 %v753
  %818 = vmatprep.subr.mxu0 0.0
  %819 = vmatpush1.msra.mxu0 %v754
  %820 = vmatprep.subr.mxu0 0.0
  %821 = vmatpush1.msra.mxu0 %v755
  %822 = vmatprep.subr.mxu0 0.0
  %823 = vmatpush1.msra.mxu0 %v756
  %824 = vmatprep.subr.mxu0 0.0
  %825 = vmatpush1.msra.mxu0 %v757
  %826 = vmatprep.subr.mxu0 0.0
  %827 = vmatpush1.msra.mxu0 %v758
  %828 = vmatprep.subr.mxu0 0.0
  %829 = vmatpush1.msra.mxu0 %v759
  %830 = vmatprep.subr.mxu0 0.0
  %831 = vmatpush1.msra.mxu0 %v760
  %832 = vmatprep.subr.mxu0 0.0
  %833 = vmatpush1.msra.mxu0 %v761
  %834 = vmatprep.subr.mxu0 0.0
  %835 = vmatpush1.msra.mxu0 %v762
  %836 = vmatprep.subr.mxu0 0.0
  %837 = vmatpush1.msra.mxu0 %v763
  %838 = vmatprep.subr.mxu0 0.0
  %839 = vmatpush1.msra.mxu0 %v764
  %840 = vmatprep.subr.mxu0 0.0
  %841 = vmatpush1.msra.mxu0 %v765
  %842 = vmatprep.subr.mxu0 0.0
  %843 = vmatpush1.msra.mxu0 %v766
  %844 = vmatprep.subr.mxu0 0.0
  %845 = vmatpush1.msra.mxu0 %v767
  %846 = vmatprep.subr.mxu0 0.0
  %847 = vmatpush1.msra.mxu0 %v768
  %848 = vmatprep.subr.mxu0 0.0
  %849 = vmatpush1.msra.mxu0 %v769
  %850 = vmatprep.subr.mxu0 0.0
  %851 = vmatpush1.msra.mxu0 %v770
  %852 = vmatprep.subr.mxu0 0.0
  %853 = vmatpush1.msra.mxu0 %v771
  %854 = vmatprep.subr.mxu0 0.0
  %855 = vmatpush1.msra.mxu0 %v772
  %856 = vmatprep.subr.mxu0 0.0
  %857 = vmatpush1.msra.mxu0 %v773
  %858 = vmatprep.subr.mxu0 0.0
  %859 = vmatpush1.msra.mxu0 %v774
  %860 = vmatprep.subr.mxu0 0.0
  %861 = vmatpush1.msra.mxu0 %v775
  %862 = vmatprep.subr.mxu0 0.0
  %863 = vmatpush1.msra.mxu0 %v776
  %864 = vmatprep.subr.mxu0 0.0
  %865 = vmatpush1.msra.mxu0 %v777
  %866 = vmatprep.mubr.f32.mxu0 %v741
  %867 = vmatmul.mubr.f32.gmra.mrb[0].mxu0 %v740
  %v868 = vpop.f32.mrb[0].mxu0
  %v869 = vadd.f32 %v789, %v868
  %v870 = vpop.f32.mrb[0].mxu0
  %871 = vmatprep.mubr.f32.mxu0 %v744
  %872 = vmatmul.mubr.f32.gmra.mrb[0].mxu0 %v743
  %v873 = vpop.f32.mrb[0].mxu0
  %v874 = vadd.f32 %v789, %v873
  %v875 = vpop.f32.mrb[0].mxu0
  %876 = vdwg.mxu0
  %877 = vmatprep.subr.mxu0 0.0
  %878 = vmatpush1.msra.mxu0 %v778
  %879 = vmatprep.subr.mxu0 0.0
  %880 = vmatpush1.msra.mxu0 %v779
  %881 = vmatprep.subr.mxu0 0.0
  %882 = vmatpush1.msra.mxu0 %v780
  %883 = vmatprep.subr.mxu0 0.0
  %884 = vmatpush1.msra.mxu0 %v781
  %885 = vmatprep.subr.mxu0 0.0
  %886 = vmatpush1.msra.mxu0 %v782
  %887 = vmatprep.subr.mxu0 0.0
  %888 = vmatpush1.msra.mxu0 %v800
  %889 = vmatprep.subr.mxu0 0.0
  %890 = vmatpush1.msra.mxu0 0.0
  %891 = vmatprep.subr.mxu0 0.0
  %892 = vmatpush1.msra.mxu0 0.0
  %893 = vmatprep.subr.mxu0 0.0
  %894 = vmatpush1.msra.mxu0 0.0
  %895 = vmatprep.subr.mxu0 0.0
  %896 = vmatpush1.msra.mxu0 0.0
  %897 = vmatprep.subr.mxu0 0.0
  %898 = vmatpush1.msra.mxu0 0.0
  %899 = vmatprep.subr.mxu0 0.0
  %900 = vmatpush1.msra.mxu0 0.0
  %901 = vmatprep.subr.mxu0 0.0
  %902 = vmatpush1.msra.mxu0 0.0
  %903 = vmatprep.subr.mxu0 0.0
  %904 = vmatpush1.msra.mxu0 0.0
  %905 = vmatprep.subr.mxu0 0.0
  %906 = vmatpush1.msra.mxu0 0.0
  %907 = vmatprep.subr.mxu0 0.0
  %908 = vmatpush1.msra.mxu0 0.0
  %909 = vmatprep.subr.mxu0 0.0
  %910 = vmatpush1.msra.mxu0 0.0
  %911 = vmatprep.subr.mxu0 0.0
  %912 = vmatpush1.msra.mxu0 0.0
  %913 = vmatprep.subr.mxu0 0.0
  %914 = vmatpush1.msra.mxu0 0.0
  %915 = vmatprep.subr.mxu0 0.0
  %916 = vmatpush1.msra.mxu0 0.0
  %917 = vmatprep.subr.mxu0 0.0
  %918 = vmatpush1.msra.mxu0 0.0
  %919 = vmatprep.subr.mxu0 0.0
  %920 = vmatpush1.msra.mxu0 0.0
  %921 = vmatprep.subr.mxu0 0.0
  %922 = vmatpush1.msra.mxu0 0.0
  %923 = vmatprep.subr.mxu0 0.0
  %924 = vmatpush1.msra.mxu0 0.0
  %925 = vmatprep.subr.mxu0 0.0
  %926 = vmatpush1.msra.mxu0 0.0
  %927 = vmatprep.subr.mxu0 0.0
  %928 = vmatpush1.msra.mxu0 0.0
  %929 = vmatprep.subr.mxu0 0.0
  %930 = vmatpush1.msra.mxu0 0.0
  %931 = vmatprep.subr.mxu0 0.0
  %932 = vmatpush1.msra.mxu0 0.0
  %933 = vmatprep.subr.mxu0 0.0
  %934 = vmatpush1.msra.mxu0 0.0
  %935 = vmatprep.subr.mxu0 0.0
  %936 = vmatpush1.msra.mxu0 0.0
  %937 = vmatprep.subr.mxu0 0.0
  %938 = vmatpush1.msra.mxu0 0.0
  %939 = vmatprep.subr.mxu0 0.0
  %940 = vmatpush1.msra.mxu0 0.0
  %941 = vmatprep.mubr.f32.mxu0 0.0
  %942 = vmatmul.mubr.f32.gmra.mrb[0].mxu0 %v793
  %v943 = vpop.f32.mrb[0].mxu0
  %v944 = vadd.f32 %v869, %v943
  %v945 = vpop.f32.mrb[0].mxu0
  %946 = vmatprep.mubr.f32.mxu0 0.0
  %947 = vmatmul.mubr.f32.gmra.mrb[0].mxu0 %v796
  %v948 = vpop.f32.mrb[0].mxu0
  %v949 = vadd.f32 %v874, %v948
  %v950 = vpop.f32.mrb[0].mxu0
  %951 = vdwg.mxu0
  %v952 = vtanh.pop %v944
  %v953 = vtanh.pop %v949
  %954 = vst [vmem:[%s7] sm:$0xff] %v952
  %955 = vst [vmem:[%s7 + $0x8] sm:$0xff] %v953
  // Predicated region
  $region30: #{actor_forward.1} parent=0 // pred_check
    _
  $region31: #{actor_forward.1} parent=0 // pred_check_branch
    %957 = sbr.rel (0) target = $region33
  $region32: #{actor_forward.1} parent=0 // pred_region
    _
  $region33: #{actor_forward.1} parent=0 // pred_fallthru
    _
  // Predicated region
  $region34: #{actor_forward.1} parent=0 // pred_check
    _
  $region35: #{actor_forward.1} parent=0 // pred_check_branch
    %959 = sbr.rel (0) target = $region37
  $region36: #{actor_forward.1} parent=0 // pred_region
    _
  $region37: #{actor_forward.1} parent=0 // pred_fallthru
    _

</llo_original>
